<compile_context>
chip_gen: v7x
topology: tpu7x:2x2x1
jax: 0.10.0
libtpu: 0.0.40
codegen_flags: <defaults>
</compile_context>

<pallas_src>
import functools

import jax
import jax.numpy as jnp
from jax import lax
from jax.experimental import pallas as pl
from jax.experimental.pallas import tpu as pltpu


def basic_block_kernel(x_ref, w1_ref, w2_ref, s1_ref, t1_ref, s2_ref, t2_ref,
                       mask_ref, out_ref, *, width):
    # x_ref   : (1, C, H*W)  one image; channels on sublanes, flat spatial on lanes
    # w*_ref  : (C, 9*C)     conv weights, tap-major ((kh*3+kw)*C + c_in)
    # s*/t*   : (C, 1)       folded BN scale / shift (conv bias folded into t)
    # mask_ref: (9, H*W)     1.0 where a tap's source pixel is in-bounds, else 0.0
    # out_ref : (1, C, H*W)
    x = x_ref[0]                                        # (C, HW)
    hw = x.shape[1]

    # Boundary masks: read once, reused by both convs.
    masks = [mask_ref[t:t + 1, :] for t in range(9)]    # each (1, HW)

    def im2col(y):
        """Build the (9*C, HW) patch slab for a 3x3 / stride-1 / pad-1 conv."""
        taps = []
        t = 0
        for dh in (-1, 0, 1):
            for dw in (-1, 0, 1):
                if dh == 0 and dw == 0:
                    taps.append(y)                      # center tap: no shift/mask
                else:
                    off = dh * width + dw               # flat-index shift
                    rolled = pltpu.roll(y, shift=(-off) % hw, axis=1)
                    taps.append(rolled * masks[t])      # zero the wrapped pixels
                t += 1
        return jnp.concatenate(taps, axis=0)            # (9*C, HW)

    # conv1 -> bn1 (folded, bias included) -> relu   (single K=9C matmul)
    y1 = jnp.dot(w1_ref[...], im2col(x), preferred_element_type=jnp.float32)
    y1 = jnp.maximum(y1 * s1_ref[...] + t1_ref[...], 0.0)

    # conv2 -> bn2 (folded) -> residual add -> relu
    y2 = jnp.dot(w2_ref[...], im2col(y1), preferred_element_type=jnp.float32)
    y2 = y2 * s2_ref[...] + t2_ref[...]
    out_ref[0] = jnp.maximum(y2 + x, 0.0)               # lane-dense (C, HW) store


def basic_block_encoder(x_nchw, params):
    """Forward pass of BasicBlock_encoder. x_nchw: (N, C, H, W) float32."""
    eps = 0.001
    N, C, H, W = x_nchw.shape
    HW = H * W
    x_flat = x_nchw.reshape(N, C, HW).astype(jnp.float32)

    # PyTorch OIHW -> (C_out, 9*C_in), tap-major to match the kernel's im2col.
    w1 = jnp.transpose(params["w1"], (0, 2, 3, 1)).reshape(C, 9 * C)
    w2 = jnp.transpose(params["w2"], (0, 2, 3, 1)).reshape(C, 9 * C)

    # Fold eval-mode BN (and the conv bias) into per-channel scale / shift.
    s1 = params["g1"] / jnp.sqrt(params["v1"] + eps)
    t1 = (params["b1"] - params["m1"]) * s1 + params["be1"]
    s2 = params["g2"] / jnp.sqrt(params["v2"] + eps)
    t2 = (params["b2"] - params["m2"]) * s2 + params["be2"]
    s1, t1 = s1.reshape(C, 1), t1.reshape(C, 1)
    s2, t2 = s2.reshape(C, 1), t2.reshape(C, 1)

    # In-bounds masks for the 9 taps over the flattened spatial axis.
    p = jnp.arange(HW, dtype=jnp.int32)
    hh, ww = p // W, p % W
    masks = jnp.stack(
        [((hh + dh >= 0) & (hh + dh < H) &
          (ww + dw >= 0) & (ww + dw < W)).astype(jnp.float32)
         for dh in (-1, 0, 1) for dw in (-1, 0, 1)],
        axis=0)                                          # (9, HW)

    out_flat = pl.pallas_call(
        functools.partial(basic_block_kernel, width=W),
        out_shape=jax.ShapeDtypeStruct((N, C, HW), jnp.float32),
        grid_spec=pltpu.PrefetchScalarGridSpec(
            num_scalar_prefetch=0,
            grid=(N,),
            in_specs=[
                pl.BlockSpec((1, C, HW), lambda n: (n, 0, 0)),
                pl.BlockSpec((C, 9 * C), lambda n: (0, 0)),
                pl.BlockSpec((C, 9 * C), lambda n: (0, 0)),
                pl.BlockSpec((C, 1), lambda n: (0, 0)),
                pl.BlockSpec((C, 1), lambda n: (0, 0)),
                pl.BlockSpec((C, 1), lambda n: (0, 0)),
                pl.BlockSpec((C, 1), lambda n: (0, 0)),
                pl.BlockSpec((9, HW), lambda n: (0, 0)),
            ],
            out_specs=pl.BlockSpec((1, C, HW), lambda n: (n, 0, 0)),
        ),
        compiler_params=pltpu.CompilerParams(
            dimension_semantics=("parallel",)),
    )(x_flat, w1, w2, s1, t1, s2, t2, masks)

    return out_flat.reshape(N, C, H, W)


def reference_forward(x, params):
    """Pure-JAX reference (lax.conv, NCHW) for correctness checking."""
    eps = 0.001
    dn = ("NCHW", "OIHW", "NCHW")

    def conv(inp, w, b):
        y = lax.conv_general_dilated(inp, w, (1, 1), ((1, 1), (1, 1)),
                                     dimension_numbers=dn,
                                     precision=lax.Precision.HIGHEST)
        return y + b.reshape(1, -1, 1, 1)

    def bn(inp, g, be, m, v):
        r = lambda a: a.reshape(1, -1, 1, 1)
        return (inp - r(m)) / jnp.sqrt(r(v) + eps) * r(g) + r(be)

    y = conv(x, params["w1"], params["b1"])
    y = jnp.maximum(bn(y, params["g1"], params["be1"],
                       params["m1"], params["v1"]), 0.0)
    y = conv(y, params["w2"], params["b2"])
    y = bn(y, params["g2"], params["be2"], params["m2"], params["v2"])
    return jnp.maximum(y + x, 0.0)


def make_params(key, chann):
    ks = jax.random.split(key, 10)
    f = jnp.float32
    return {
        "w1": 0.1 * jax.random.normal(ks[0], (chann, chann, 3, 3), f),
        "b1": 0.1 * jax.random.normal(ks[1], (chann,), f),
        "w2": 0.1 * jax.random.normal(ks[2], (chann, chann, 3, 3), f),
        "b2": 0.1 * jax.random.normal(ks[3], (chann,), f),
        "g1": 1.0 + 0.1 * jax.random.normal(ks[4], (chann,), f),
        "be1": 0.1 * jax.random.normal(ks[5], (chann,), f),
        "m1": 0.1 * jax.random.normal(ks[6], (chann,), f),
        "v1": 1.0 + 0.5 * jax.nn.sigmoid(jax.random.normal(ks[7], (chann,), f)),
        "g2": 1.0 + 0.1 * jax.random.normal(ks[8], (chann,), f),
        "be2": 0.1 * jax.random.normal(ks[9], (chann,), f),
        "m2": 0.05 * jnp.ones((chann,), f),
        "v2": 1.2 * jnp.ones((chann,), f),
    }


if __name__ == "__main__":
    N, C, H, W = 2, 16, 16, 16   # chann=16 default of the module
    key = jax.random.PRNGKey(0)
    kx, kp = jax.random.split(key)
    x = jax.random.normal(kx, (N, C, H, W), jnp.float32)
    params = make_params(kp, C)

    out = jax.jit(basic_block_encoder)(x, params)
    out = jax.block_until_ready(out)

    ref = reference_forward(x, params)
    err = float(jnp.max(jnp.abs(out - ref)))
    assert out.shape == (N, C, H, W)
    assert err < 2e-3, f"max abs error too large: {err}"
    print("KERNEL_OK")
</pallas_src>

<mosaic_0001>
module attributes {stable_mosaic.version = 11 : i64} {
  func.func @basic_block_kernel(%arg0: i32, %arg1: memref<1x16x256xf32, #tpu.memory_space<vmem>>, %arg2: memref<16x144xf32, #tpu.memory_space<vmem>>, %arg3: memref<16x144xf32, #tpu.memory_space<vmem>>, %arg4: memref<16x1xf32, #tpu.memory_space<vmem>>, %arg5: memref<16x1xf32, #tpu.memory_space<vmem>>, %arg6: memref<16x1xf32, #tpu.memory_space<vmem>>, %arg7: memref<16x1xf32, #tpu.memory_space<vmem>>, %arg8: memref<9x256xf32, #tpu.memory_space<vmem>>, %arg9: memref<1x16x256xf32, #tpu.memory_space<vmem>>) attributes {dimension_semantics = [#tpu.dimension_semantics<parallel>], iteration_bounds = array<i64: 2>, scalar_prefetch = 0 : i64, scratch_operands = 0 : i64, tpu.core_type = #tpu.core_type<tc>, window_params = [{transform_indices = @transform_0, window_bounds = array<i64: 1, 16, 256>}, {pipeline_mode = #tpu.pipeline_mode<synchronous>, transform_indices = @transform_1, window_bounds = array<i64: 16, 144>}, {pipeline_mode = #tpu.pipeline_mode<synchronous>, transform_indices = @transform_2, window_bounds = array<i64: 16, 144>}, {pipeline_mode = #tpu.pipeline_mode<synchronous>, transform_indices = @transform_3, window_bounds = array<i64: 16, 1>}, {pipeline_mode = #tpu.pipeline_mode<synchronous>, transform_indices = @transform_4, window_bounds = array<i64: 16, 1>}, {pipeline_mode = #tpu.pipeline_mode<synchronous>, transform_indices = @transform_5, window_bounds = array<i64: 16, 1>}, {pipeline_mode = #tpu.pipeline_mode<synchronous>, transform_indices = @transform_6, window_bounds = array<i64: 16, 1>}, {pipeline_mode = #tpu.pipeline_mode<synchronous>, transform_indices = @transform_7, window_bounds = array<i64: 9, 256>}, {transform_indices = @transform_8, window_bounds = array<i64: 1, 16, 256>}]} {
    %c0 = arith.constant 0 : index
    %c0_0 = arith.constant 0 : index
    %c0_1 = arith.constant 0 : index
    %0 = vector.load %arg1[%c0, %c0_0, %c0_1] : memref<1x16x256xf32, #tpu.memory_space<vmem>>, vector<1x16x256xf32>
    %1 = vector.shape_cast %0 : vector<1x16x256xf32> to vector<16x256xf32>
    %c0_2 = arith.constant 0 : index
    %c0_3 = arith.constant 0 : index
    %2 = vector.load %arg8[%c0_2, %c0_3] : memref<9x256xf32, #tpu.memory_space<vmem>>, vector<1x256xf32>
    %c1 = arith.constant 1 : index
    %c0_4 = arith.constant 0 : index
    %3 = vector.load %arg8[%c1, %c0_4] : memref<9x256xf32, #tpu.memory_space<vmem>>, vector<1x256xf32>
    %c2 = arith.constant 2 : index
    %c0_5 = arith.constant 0 : index
    %4 = vector.load %arg8[%c2, %c0_5] : memref<9x256xf32, #tpu.memory_space<vmem>>, vector<1x256xf32>
    %c3 = arith.constant 3 : index
    %c0_6 = arith.constant 0 : index
    %5 = vector.load %arg8[%c3, %c0_6] : memref<9x256xf32, #tpu.memory_space<vmem>>, vector<1x256xf32>
    %c5 = arith.constant 5 : index
    %c0_7 = arith.constant 0 : index
    %6 = vector.load %arg8[%c5, %c0_7] : memref<9x256xf32, #tpu.memory_space<vmem>>, vector<1x256xf32>
    %c6 = arith.constant 6 : index
    %c0_8 = arith.constant 0 : index
    %7 = vector.load %arg8[%c6, %c0_8] : memref<9x256xf32, #tpu.memory_space<vmem>>, vector<1x256xf32>
    %c7 = arith.constant 7 : index
    %c0_9 = arith.constant 0 : index
    %8 = vector.load %arg8[%c7, %c0_9] : memref<9x256xf32, #tpu.memory_space<vmem>>, vector<1x256xf32>
    %c8 = arith.constant 8 : index
    %c0_10 = arith.constant 0 : index
    %9 = vector.load %arg8[%c8, %c0_10] : memref<9x256xf32, #tpu.memory_space<vmem>>, vector<1x256xf32>
    %c0_11 = arith.constant 0 : index
    %c0_12 = arith.constant 0 : index
    %10 = vector.load %arg2[%c0_11, %c0_12] : memref<16x144xf32, #tpu.memory_space<vmem>>, vector<16x144xf32>
    %c17_i32 = arith.constant 17 : i32
    %11 = tpu.dynamic_rotate %1 by %c17_i32 dim 1 : vector<16x256xf32>, i32 -> vector<16x256xf32>
    %12 = vector.broadcast %2 : vector<1x256xf32> to vector<16x256xf32>
    %13 = arith.mulf %11, %12 : vector<16x256xf32>
    %c16_i32 = arith.constant 16 : i32
    %14 = tpu.dynamic_rotate %1 by %c16_i32 dim 1 : vector<16x256xf32>, i32 -> vector<16x256xf32>
    %15 = vector.broadcast %3 : vector<1x256xf32> to vector<16x256xf32>
    %16 = arith.mulf %14, %15 : vector<16x256xf32>
    %c15_i32 = arith.constant 15 : i32
    %17 = tpu.dynamic_rotate %1 by %c15_i32 dim 1 : vector<16x256xf32>, i32 -> vector<16x256xf32>
    %18 = vector.broadcast %4 : vector<1x256xf32> to vector<16x256xf32>
    %19 = arith.mulf %17, %18 : vector<16x256xf32>
    %c1_i32 = arith.constant 1 : i32
    %20 = tpu.dynamic_rotate %1 by %c1_i32 dim 1 : vector<16x256xf32>, i32 -> vector<16x256xf32>
    %21 = vector.broadcast %5 : vector<1x256xf32> to vector<16x256xf32>
    %22 = arith.mulf %20, %21 : vector<16x256xf32>
    %c255_i32 = arith.constant 255 : i32
    %23 = tpu.dynamic_rotate %1 by %c255_i32 dim 1 : vector<16x256xf32>, i32 -> vector<16x256xf32>
    %24 = vector.broadcast %6 : vector<1x256xf32> to vector<16x256xf32>
    %25 = arith.mulf %23, %24 : vector<16x256xf32>
    %c241_i32 = arith.constant 241 : i32
    %26 = tpu.dynamic_rotate %1 by %c241_i32 dim 1 : vector<16x256xf32>, i32 -> vector<16x256xf32>
    %27 = vector.broadcast %7 : vector<1x256xf32> to vector<16x256xf32>
    %28 = arith.mulf %26, %27 : vector<16x256xf32>
    %c240_i32 = arith.constant 240 : i32
    %29 = tpu.dynamic_rotate %1 by %c240_i32 dim 1 : vector<16x256xf32>, i32 -> vector<16x256xf32>
    %30 = vector.broadcast %8 : vector<1x256xf32> to vector<16x256xf32>
    %31 = arith.mulf %29, %30 : vector<16x256xf32>
    %c239_i32 = arith.constant 239 : i32
    %32 = tpu.dynamic_rotate %1 by %c239_i32 dim 1 : vector<16x256xf32>, i32 -> vector<16x256xf32>
    %33 = vector.broadcast %9 : vector<1x256xf32> to vector<16x256xf32>
    %34 = arith.mulf %32, %33 : vector<16x256xf32>
    %35 = tpu.concatenate %13, %16, %19, %22, %1, %25, %28, %31, %34 in 0 : vector<16x256xf32>, vector<16x256xf32>, vector<16x256xf32>, vector<16x256xf32>, vector<16x256xf32>, vector<16x256xf32>, vector<16x256xf32>, vector<16x256xf32>, vector<16x256xf32> -> vector<144x256xf32>
    %cst = arith.constant dense<0.000000e+00> : vector<16x256xf32>
    %36 = tpu.matmul %10, %35, %cst {dimension_numbers = #tpu.dot_dimension_numbers<[1], [0], [0], [1], [0, 0, 1, 1], [], []>} : vector<16x144xf32>, vector<144x256xf32>, vector<16x256xf32> -> vector<16x256xf32>
    %c0_13 = arith.constant 0 : index
    %c0_14 = arith.constant 0 : index
    %37 = vector.load %arg4[%c0_13, %c0_14] : memref<16x1xf32, #tpu.memory_space<vmem>>, vector<16x1xf32>
    %38 = vector.broadcast %37 : vector<16x1xf32> to vector<16x256xf32>
    %39 = arith.mulf %36, %38 : vector<16x256xf32>
    %c0_15 = arith.constant 0 : index
    %c0_16 = arith.constant 0 : index
    %40 = vector.load %arg5[%c0_15, %c0_16] : memref<16x1xf32, #tpu.memory_space<vmem>>, vector<16x1xf32>
    %41 = vector.broadcast %40 : vector<16x1xf32> to vector<16x256xf32>
    %42 = arith.addf %39, %41 : vector<16x256xf32>
    %cst_17 = arith.constant 0.000000e+00 : f32
    %43 = vector.broadcast %cst_17 : f32 to vector<16x256xf32>
    %44 = arith.maximumf %42, %43 : vector<16x256xf32>
    %c0_18 = arith.constant 0 : index
    %c0_19 = arith.constant 0 : index
    %45 = vector.load %arg3[%c0_18, %c0_19] : memref<16x144xf32, #tpu.memory_space<vmem>>, vector<16x144xf32>
    %c17_i32_20 = arith.constant 17 : i32
    %46 = tpu.dynamic_rotate %44 by %c17_i32_20 dim 1 : vector<16x256xf32>, i32 -> vector<16x256xf32>
    %47 = vector.broadcast %2 : vector<1x256xf32> to vector<16x256xf32>
    %48 = arith.mulf %46, %47 : vector<16x256xf32>
    %c16_i32_21 = arith.constant 16 : i32
    %49 = tpu.dynamic_rotate %44 by %c16_i32_21 dim 1 : vector<16x256xf32>, i32 -> vector<16x256xf32>
    %50 = vector.broadcast %3 : vector<1x256xf32> to vector<16x256xf32>
    %51 = arith.mulf %49, %50 : vector<16x256xf32>
    %c15_i32_22 = arith.constant 15 : i32
    %52 = tpu.dynamic_rotate %44 by %c15_i32_22 dim 1 : vector<16x256xf32>, i32 -> vector<16x256xf32>
    %53 = vector.broadcast %4 : vector<1x256xf32> to vector<16x256xf32>
    %54 = arith.mulf %52, %53 : vector<16x256xf32>
    %c1_i32_23 = arith.constant 1 : i32
    %55 = tpu.dynamic_rotate %44 by %c1_i32_23 dim 1 : vector<16x256xf32>, i32 -> vector<16x256xf32>
    %56 = vector.broadcast %5 : vector<1x256xf32> to vector<16x256xf32>
    %57 = arith.mulf %55, %56 : vector<16x256xf32>
    %c255_i32_24 = arith.constant 255 : i32
    %58 = tpu.dynamic_rotate %44 by %c255_i32_24 dim 1 : vector<16x256xf32>, i32 -> vector<16x256xf32>
    %59 = vector.broadcast %6 : vector<1x256xf32> to vector<16x256xf32>
    %60 = arith.mulf %58, %59 : vector<16x256xf32>
    %c241_i32_25 = arith.constant 241 : i32
    %61 = tpu.dynamic_rotate %44 by %c241_i32_25 dim 1 : vector<16x256xf32>, i32 -> vector<16x256xf32>
    %62 = vector.broadcast %7 : vector<1x256xf32> to vector<16x256xf32>
    %63 = arith.mulf %61, %62 : vector<16x256xf32>
    %c240_i32_26 = arith.constant 240 : i32
    %64 = tpu.dynamic_rotate %44 by %c240_i32_26 dim 1 : vector<16x256xf32>, i32 -> vector<16x256xf32>
    %65 = vector.broadcast %8 : vector<1x256xf32> to vector<16x256xf32>
    %66 = arith.mulf %64, %65 : vector<16x256xf32>
    %c239_i32_27 = arith.constant 239 : i32
    %67 = tpu.dynamic_rotate %44 by %c239_i32_27 dim 1 : vector<16x256xf32>, i32 -> vector<16x256xf32>
    %68 = vector.broadcast %9 : vector<1x256xf32> to vector<16x256xf32>
    %69 = arith.mulf %67, %68 : vector<16x256xf32>
    %70 = tpu.concatenate %48, %51, %54, %57, %44, %60, %63, %66, %69 in 0 : vector<16x256xf32>, vector<16x256xf32>, vector<16x256xf32>, vector<16x256xf32>, vector<16x256xf32>, vector<16x256xf32>, vector<16x256xf32>, vector<16x256xf32>, vector<16x256xf32> -> vector<144x256xf32>
    %cst_28 = arith.constant dense<0.000000e+00> : vector<16x256xf32>
    %71 = tpu.matmul %45, %70, %cst_28 {dimension_numbers = #tpu.dot_dimension_numbers<[1], [0], [0], [1], [0, 0, 1, 1], [], []>} : vector<16x144xf32>, vector<144x256xf32>, vector<16x256xf32> -> vector<16x256xf32>
    %c0_29 = arith.constant 0 : index
    %c0_30 = arith.constant 0 : index
    %72 = vector.load %arg6[%c0_29, %c0_30] : memref<16x1xf32, #tpu.memory_space<vmem>>, vector<16x1xf32>
    %73 = vector.broadcast %72 : vector<16x1xf32> to vector<16x256xf32>
    %74 = arith.mulf %71, %73 : vector<16x256xf32>
    %c0_31 = arith.constant 0 : index
    %c0_32 = arith.constant 0 : index
    %75 = vector.load %arg7[%c0_31, %c0_32] : memref<16x1xf32, #tpu.memory_space<vmem>>, vector<16x1xf32>
    %76 = vector.broadcast %75 : vector<16x1xf32> to vector<16x256xf32>
    %77 = arith.addf %74, %76 : vector<16x256xf32>
    %78 = arith.addf %77, %1 : vector<16x256xf32>
    %cst_33 = arith.constant 0.000000e+00 : f32
    %79 = vector.broadcast %cst_33 : f32 to vector<16x256xf32>
    %80 = arith.maximumf %78, %79 : vector<16x256xf32>
    %c0_34 = arith.constant 0 : index
    %c0_35 = arith.constant 0 : index
    %c0_36 = arith.constant 0 : index
    %81 = vector.load %arg9[%c0_34, %c0_35, %c0_36] : memref<1x16x256xf32, #tpu.memory_space<vmem>>, vector<1x16x256xf32>
    %82 = vector.shape_cast %81 : vector<1x16x256xf32> to vector<16x256xf32>
    %83 = vector.shape_cast %80 : vector<16x256xf32> to vector<1x16x256xf32>
    tpu.vector_store %arg9[%c0_34, %c0_35, %c0_36], %83 {strides = array<i32>} : memref<1x16x256xf32, #tpu.memory_space<vmem>>, vector<1x16x256xf32>,
    return
  }
  func.func @transform_0(%arg0: i32) -> (i32, i32, i32) {
    %c0_i32 = arith.constant 0 : i32
    %c0_i32_0 = arith.constant 0 : i32
    %c0_i32_1 = arith.constant 0 : i32
    return %arg0, %c0_i32, %c0_i32_0 : i32, i32, i32
  }
  func.func @transform_1(%arg0: i32) -> (i32, i32) {
    %c0_i32 = arith.constant 0 : i32
    %c0_i32_0 = arith.constant 0 : i32
    %c0_i32_1 = arith.constant 0 : i32
    return %c0_i32, %c0_i32_0 : i32, i32
  }
  func.func @transform_2(%arg0: i32) -> (i32, i32) {
    %c0_i32 = arith.constant 0 : i32
    %c0_i32_0 = arith.constant 0 : i32
    %c0_i32_1 = arith.constant 0 : i32
    return %c0_i32, %c0_i32_0 : i32, i32
  }
  func.func @transform_3(%arg0: i32) -> (i32, i32) {
    %c0_i32 = arith.constant 0 : i32
    %c0_i32_0 = arith.constant 0 : i32
    %c0_i32_1 = arith.constant 0 : i32
    return %c0_i32, %c0_i32_0 : i32, i32
  }
  func.func @transform_4(%arg0: i32) -> (i32, i32) {
    %c0_i32 = arith.constant 0 : i32
    %c0_i32_0 = arith.constant 0 : i32
    %c0_i32_1 = arith.constant 0 : i32
    return %c0_i32, %c0_i32_0 : i32, i32
  }
  func.func @transform_5(%arg0: i32) -> (i32, i32) {
    %c0_i32 = arith.constant 0 : i32
    %c0_i32_0 = arith.constant 0 : i32
    %c0_i32_1 = arith.constant 0 : i32
    return %c0_i32, %c0_i32_0 : i32, i32
  }
  func.func @transform_6(%arg0: i32) -> (i32, i32) {
    %c0_i32 = arith.constant 0 : i32
    %c0_i32_0 = arith.constant 0 : i32
    %c0_i32_1 = arith.constant 0 : i32
    return %c0_i32, %c0_i32_0 : i32, i32
  }
  func.func @transform_7(%arg0: i32) -> (i32, i32) {
    %c0_i32 = arith.constant 0 : i32
    %c0_i32_0 = arith.constant 0 : i32
    %c0_i32_1 = arith.constant 0 : i32
    return %c0_i32, %c0_i32_0 : i32, i32
  }
  func.func @transform_8(%arg0: i32) -> (i32, i32, i32) {
    %c0_i32 = arith.constant 0 : i32
    %c0_i32_0 = arith.constant 0 : i32
    %c0_i32_1 = arith.constant 0 : i32
    return %arg0, %c0_i32, %c0_i32_0 : i32, i32, i32
  }
}

</mosaic_0001>

<llo_original>
// kernel: basic_block_encoder.1
$region0: #{basic_block_encoder.1}
  #allocation0 [shape = 'u32[]', space=smem, size = 0x4, offset = 0x4, fixed_abs, tag = 'smem constant byte address 0x4 - core index']
  #allocation1 [shape = 'u32[144,128]{1,0:T(1,128)}', space=vmem, size = 0x12000, scoped, tag = 'internal scratch']
  %s0 = inlined_call_operand.vmem [shape: f32[2,16,256], index: 0, kind: input, shape index: {}]
  %s1 = inlined_call_operand.vmem [shape: f32[16,144], index: 1, kind: input, shape index: {}]
  %s2 = inlined_call_operand.vmem [shape: f32[16,144], index: 2, kind: input, shape index: {}]
  %s3 = inlined_call_operand.vmem [shape: f32[16,1], index: 3, kind: input, shape index: {}]
  %s4 = inlined_call_operand.vmem [shape: f32[16,1], index: 4, kind: input, shape index: {}]
  %s5 = inlined_call_operand.vmem [shape: f32[16,1], index: 5, kind: input, shape index: {}]
  %s6 = inlined_call_operand.vmem [shape: f32[16,1], index: 6, kind: input, shape index: {}]
  %s7 = inlined_call_operand.vmem [shape: f32[9,256], index: 7, kind: input, shape index: {}]
  %s8 = inlined_call_operand.vmem [shape: f32[2,16,256], index: 8, kind: output, shape index: {}]
  %s9 = sld [smem:[#allocation0]]
  $region65: #{basic_block_encoder.1} parent=0
    _
  %s11 = ssub.s32 1, %s9
  %s12 = scalar_select 0, %s11, %s9
  loop: start=0, step=1, limit=4
  $region2: #{basic_block_encoder.1} parent=0 // loop_pre_header
    _
  $region3: #{basic_block_encoder.1} parent=0 // loop_header
    %s14 = sphi 0, %s18
    %p15 = scmp.ge.s32.totalorder %s14, 4
    %s24 = sphi 0, %s26
    %s27 = sphi 0, %s24
    %s28 = sphi 0, %s27
    %s44 = sphi 0, %s28
    %s48 = sphi 0, %s48
    %s50 = sphi 0, %s48
    %s51 = sphi 0, %s50
    %s65 = sphi 0, %s51
    %s69 = sphi 0, %s69
    %s71 = sphi 0, %s69
    %s72 = sphi 0, %s71
    %s86 = sphi 0, %s72
    %s90 = sphi 0, %s90
    %s92 = sphi 0, %s90
    %s93 = sphi 0, %s92
    %s107 = sphi 0, %s93
    %s111 = sphi 0, %s111
    %s113 = sphi 0, %s111
    %s114 = sphi 0, %s113
    %s128 = sphi 0, %s114
    %s132 = sphi 0, %s132
    %s134 = sphi 0, %s132
    %s135 = sphi 0, %s134
    %s149 = sphi 0, %s135
    %s153 = sphi 0, %s153
    %s155 = sphi 0, %s153
    %s156 = sphi 0, %s155
    %s170 = sphi 0, %s156
    %s174 = sphi 0, %s174
    %s176 = sphi 0, %s174
    %s177 = sphi 0, %s176
    %s191 = sphi 0, %s177
    %s197 = sphi 0, %s199
    %s200 = sphi 0, %s197
    %s201 = sphi 0, %s200
    %s217 = sphi 0, %s201
  $region4: #{basic_block_encoder.1} parent=0 // loop_header_branch
    %17 = sbr.rel (%p15) target = $region8
  $region5: #{basic_block_encoder.1} parent=0 // loop_body
    %s19 = ssub.s32 %s14, 1
    %s20 = ssub.s32 %s14, 2
    %s21 = sadd.s32 %s14, 1
    %s22 = ssub.s32 %s14, %s21
    %p23 = scmp.eq.s32.totalorder %s22, 0
    %s25 = sadd.s32 %s24, 1
    %s26 = scalar_select %p23, %s24, %s25
    %p29 = pneg %p23
    %p30 = scmp.eq.s32.totalorder %s14, 1
    %p31 = por %p29, %p30
    %p32 = scmp.ne.s32.totalorder %s24, %s27
    %p33 = scmp.eq.s32.totalorder %s14, 0
    %p34 = por %p32, %p33
    %p35 = scmp.ne.s32.totalorder %s24, %s27
    %p36 = scmp.eq.s32.totalorder %s19, 1
    %p37 = por %p35, %p36
    %p38 = scmp.ne.s32.totalorder %s27, %s28
    %p39 = scmp.eq.s32.totalorder %s19, 0
    %p40 = por %p38, %p39
    %p41 = scmp.ne.s32.totalorder %s27, %s28
    %p42 = scmp.eq.s32.totalorder %s20, 1
    %p43 = por %p41, %p42
    %p45 = scmp.ne.s32.totalorder %s28, %s44
    %p46 = scmp.eq.s32.totalorder %s20, 0
    %p47 = por %p45, %p46
    %s49 = sadd.s32 %s48, 1
    %p52 = scmp.eq.s32.totalorder %s14, 1
    %p53 = scmp.ne.s32.totalorder %s48, %s50
    %p54 = scmp.eq.s32.totalorder %s14, 0
    %p55 = por %p53, %p54
    %p56 = scmp.ne.s32.totalorder %s48, %s50
    %p57 = scmp.eq.s32.totalorder %s19, 1
    %p58 = por %p56, %p57
    %p59 = scmp.ne.s32.totalorder %s50, %s51
    %p60 = scmp.eq.s32.totalorder %s19, 0
    %p61 = por %p59, %p60
    %p62 = scmp.ne.s32.totalorder %s50, %s51
    %p63 = scmp.eq.s32.totalorder %s20, 1
    %p64 = por %p62, %p63
    %p66 = scmp.ne.s32.totalorder %s51, %s65
    %p67 = scmp.eq.s32.totalorder %s20, 0
    %p68 = por %p66, %p67
    %s70 = sadd.s32 %s69, 1
    %p73 = scmp.eq.s32.totalorder %s14, 1
    %p74 = scmp.ne.s32.totalorder %s69, %s71
    %p75 = scmp.eq.s32.totalorder %s14, 0
    %p76 = por %p74, %p75
    %p77 = scmp.ne.s32.totalorder %s69, %s71
    %p78 = scmp.eq.s32.totalorder %s19, 1
    %p79 = por %p77, %p78
    %p80 = scmp.ne.s32.totalorder %s71, %s72
    %p81 = scmp.eq.s32.totalorder %s19, 0
    %p82 = por %p80, %p81
    %p83 = scmp.ne.s32.totalorder %s71, %s72
    %p84 = scmp.eq.s32.totalorder %s20, 1
    %p85 = por %p83, %p84
    %p87 = scmp.ne.s32.totalorder %s72, %s86
    %p88 = scmp.eq.s32.totalorder %s20, 0
    %p89 = por %p87, %p88
    %s91 = sadd.s32 %s90, 1
    %p94 = scmp.eq.s32.totalorder %s14, 1
    %p95 = scmp.ne.s32.totalorder %s90, %s92
    %p96 = scmp.eq.s32.totalorder %s14, 0
    %p97 = por %p95, %p96
    %p98 = scmp.ne.s32.totalorder %s90, %s92
    %p99 = scmp.eq.s32.totalorder %s19, 1
    %p100 = por %p98, %p99
    %p101 = scmp.ne.s32.totalorder %s92, %s93
    %p102 = scmp.eq.s32.totalorder %s19, 0
    %p103 = por %p101, %p102
    %p104 = scmp.ne.s32.totalorder %s92, %s93
    %p105 = scmp.eq.s32.totalorder %s20, 1
    %p106 = por %p104, %p105
    %p108 = scmp.ne.s32.totalorder %s93, %s107
    %p109 = scmp.eq.s32.totalorder %s20, 0
    %p110 = por %p108, %p109
    %s112 = sadd.s32 %s111, 1
    %p115 = scmp.eq.s32.totalorder %s14, 1
    %p116 = scmp.ne.s32.totalorder %s111, %s113
    %p117 = scmp.eq.s32.totalorder %s14, 0
    %p118 = por %p116, %p117
    %p119 = scmp.ne.s32.totalorder %s111, %s113
    %p120 = scmp.eq.s32.totalorder %s19, 1
    %p121 = por %p119, %p120
    %p122 = scmp.ne.s32.totalorder %s113, %s114
    %p123 = scmp.eq.s32.totalorder %s19, 0
    %p124 = por %p122, %p123
    %p125 = scmp.ne.s32.totalorder %s113, %s114
    %p126 = scmp.eq.s32.totalorder %s20, 1
    %p127 = por %p125, %p126
    %p129 = scmp.ne.s32.totalorder %s114, %s128
    %p130 = scmp.eq.s32.totalorder %s20, 0
    %p131 = por %p129, %p130
    %s133 = sadd.s32 %s132, 1
    %p136 = scmp.eq.s32.totalorder %s14, 1
    %p137 = scmp.ne.s32.totalorder %s132, %s134
    %p138 = scmp.eq.s32.totalorder %s14, 0
    %p139 = por %p137, %p138
    %p140 = scmp.ne.s32.totalorder %s132, %s134
    %p141 = scmp.eq.s32.totalorder %s19, 1
    %p142 = por %p140, %p141
    %p143 = scmp.ne.s32.totalorder %s134, %s135
    %p144 = scmp.eq.s32.totalorder %s19, 0
    %p145 = por %p143, %p144
    %p146 = scmp.ne.s32.totalorder %s134, %s135
    %p147 = scmp.eq.s32.totalorder %s20, 1
    %p148 = por %p146, %p147
    %p150 = scmp.ne.s32.totalorder %s135, %s149
    %p151 = scmp.eq.s32.totalorder %s20, 0
    %p152 = por %p150, %p151
    %s154 = sadd.s32 %s153, 1
    %p157 = scmp.eq.s32.totalorder %s14, 1
    %p158 = scmp.ne.s32.totalorder %s153, %s155
    %p159 = scmp.eq.s32.totalorder %s14, 0
    %p160 = por %p158, %p159
    %p161 = scmp.ne.s32.totalorder %s153, %s155
    %p162 = scmp.eq.s32.totalorder %s19, 1
    %p163 = por %p161, %p162
    %p164 = scmp.ne.s32.totalorder %s155, %s156
    %p165 = scmp.eq.s32.totalorder %s19, 0
    %p166 = por %p164, %p165
    %p167 = scmp.ne.s32.totalorder %s155, %s156
    %p168 = scmp.eq.s32.totalorder %s20, 1
    %p169 = por %p167, %p168
    %p171 = scmp.ne.s32.totalorder %s156, %s170
    %p172 = scmp.eq.s32.totalorder %s20, 0
    %p173 = por %p171, %p172
    %s175 = sadd.s32 %s174, 1
    %p178 = scmp.eq.s32.totalorder %s14, 1
    %p179 = scmp.ne.s32.totalorder %s174, %s176
    %p180 = scmp.eq.s32.totalorder %s14, 0
    %p181 = por %p179, %p180
    %p182 = scmp.ne.s32.totalorder %s174, %s176
    %p183 = scmp.eq.s32.totalorder %s19, 1
    %p184 = por %p182, %p183
    %p185 = scmp.ne.s32.totalorder %s176, %s177
    %p186 = scmp.eq.s32.totalorder %s19, 0
    %p187 = por %p185, %p186
    %p188 = scmp.ne.s32.totalorder %s176, %s177
    %p189 = scmp.eq.s32.totalorder %s20, 1
    %p190 = por %p188, %p189
    %p192 = scmp.ne.s32.totalorder %s177, %s191
    %p193 = scmp.eq.s32.totalorder %s20, 0
    %p194 = por %p192, %p193
    %s195 = ssub.s32 %s14, %s21
    %p196 = scmp.eq.s32.totalorder %s195, 0
    %s198 = sadd.s32 %s197, 1
    %s199 = scalar_select %p196, %s197, %s198
    %p202 = pneg %p196
    %p203 = scmp.eq.s32.totalorder %s14, 1
    %p204 = por %p202, %p203
    %p205 = scmp.ne.s32.totalorder %s197, %s200
    %p206 = scmp.eq.s32.totalorder %s14, 0
    %p207 = por %p205, %p206
    %p208 = scmp.ne.s32.totalorder %s197, %s200
    %p209 = scmp.eq.s32.totalorder %s19, 1
    %p210 = por %p208, %p209
    %p211 = scmp.ne.s32.totalorder %s200, %s201
    %p212 = scmp.eq.s32.totalorder %s19, 0
    %p213 = por %p211, %p212
    %p214 = scmp.ne.s32.totalorder %s200, %s201
    %p215 = scmp.eq.s32.totalorder %s20, 1
    %p216 = por %p214, %p215
    %p218 = scmp.ne.s32.totalorder %s201, %s217
    %p219 = scmp.eq.s32.totalorder %s20, 0
    %p220 = por %p218, %p219
    %p221 = scmp.le.s32.totalorder 1, %s14
    %p222 = scmp.lt.s32.totalorder %s14, 3
    %p223 = pnand %p221, %p222
    %p224 = pneg %p223
    // Predicated region
    $region9: #{basic_block_encoder.1} parent=5 // pred_check
      _
    $region10: #{basic_block_encoder.1} parent=5 // pred_check_branch
      %226 = sbr.rel (%p223) target = $region12
    $region11: #{basic_block_encoder.1} parent=5 // pred_region
      %s227 = ssub.s32 %s14, 1
      // Predicated region
      $region13: #{basic_block_encoder.1} parent=11 // pred_check
        %p228 = pneg %p61
      $region14: #{basic_block_encoder.1} parent=11 // pred_check_branch
        %230 = sbr.rel (%p228) target = $region16
      $region15: #{basic_block_encoder.1} parent=11 // pred_region
        _
      $region16: #{basic_block_encoder.1} parent=11 // pred_fallthru
        _
      // Predicated region
      $region17: #{basic_block_encoder.1} parent=11 // pred_check
        %p231 = pneg %p82
      $region18: #{basic_block_encoder.1} parent=11 // pred_check_branch
        %233 = sbr.rel (%p231) target = $region20
      $region19: #{basic_block_encoder.1} parent=11 // pred_region
        _
      $region20: #{basic_block_encoder.1} parent=11 // pred_fallthru
        _
      // Predicated region
      $region21: #{basic_block_encoder.1} parent=11 // pred_check
        %p234 = pneg %p103
      $region22: #{basic_block_encoder.1} parent=11 // pred_check_branch
        %236 = sbr.rel (%p234) target = $region24
      $region23: #{basic_block_encoder.1} parent=11 // pred_region
        _
      $region24: #{basic_block_encoder.1} parent=11 // pred_fallthru
        _
      // Predicated region
      $region25: #{basic_block_encoder.1} parent=11 // pred_check
        %p237 = pneg %p124
      $region26: #{basic_block_encoder.1} parent=11 // pred_check_branch
        %239 = sbr.rel (%p237) target = $region28
      $region27: #{basic_block_encoder.1} parent=11 // pred_region
        _
      $region28: #{basic_block_encoder.1} parent=11 // pred_fallthru
        _
      // Predicated region
      $region29: #{basic_block_encoder.1} parent=11 // pred_check
        %p240 = pneg %p145
      $region30: #{basic_block_encoder.1} parent=11 // pred_check_branch
        %242 = sbr.rel (%p240) target = $region32
      $region31: #{basic_block_encoder.1} parent=11 // pred_region
        _
      $region32: #{basic_block_encoder.1} parent=11 // pred_fallthru
        _
      // Predicated region
      $region33: #{basic_block_encoder.1} parent=11 // pred_check
        %p243 = pneg %p166
      $region34: #{basic_block_encoder.1} parent=11 // pred_check_branch
        %245 = sbr.rel (%p243) target = $region36
      $region35: #{basic_block_encoder.1} parent=11 // pred_region
        _
      $region36: #{basic_block_encoder.1} parent=11 // pred_fallthru
        _
      // Predicated region
      $region37: #{basic_block_encoder.1} parent=11 // pred_check
        %p246 = pneg %p187
      $region38: #{basic_block_encoder.1} parent=11 // pred_check_branch
        %248 = sbr.rel (%p246) target = $region40
      $region39: #{basic_block_encoder.1} parent=11 // pred_region
        _
      $region40: #{basic_block_encoder.1} parent=11 // pred_fallthru
        _
    $region12: #{basic_block_encoder.1} parent=5 // pred_fallthru
      _
    %p249 = scmp.lt.s32.totalorder %s14, 2
    // Predicated region
    $region41: #{basic_block_encoder.1} parent=5 // pred_check
      %p250 = pneg %p249
    $region42: #{basic_block_encoder.1} parent=5 // pred_check_branch
      %252 = sbr.rel (%p250) target = $region44
    $region43: #{basic_block_encoder.1} parent=5 // pred_region
      // Predicated region
      $region45: #{basic_block_encoder.1} parent=43 // pred_check
        %p253 = pneg %p34
      $region46: #{basic_block_encoder.1} parent=43 // pred_check_branch
        %255 = sbr.rel (%p253) target = $region48
      $region47: #{basic_block_encoder.1} parent=43 // pred_region
        %p256 = scmp.lt.s32.totalorder %s14, 1
        %s257 = scalar_select %p256, %s14, 1
        %s258 = smul.addr %s257, 4
        %s259 = smul.addr %s258, 8
        %s260 = scalar_lea.vmem %s0, %s259
      $region48: #{basic_block_encoder.1} parent=43 // pred_fallthru
        _
    $region44: #{basic_block_encoder.1} parent=5 // pred_fallthru
      _
    %p261 = scmp.le.s32.totalorder 1, %s14
    %p262 = scmp.lt.s32.totalorder %s14, 3
    %p263 = pnand %p261, %p262
    %p264 = pneg %p263
    // Predicated region
    $region49: #{basic_block_encoder.1} parent=5 // pred_check
      _
    $region50: #{basic_block_encoder.1} parent=5 // pred_check_branch
      %266 = sbr.rel (%p263) target = $region52
    $region51: #{basic_block_encoder.1} parent=5 // pred_region
      %s267 = ssub.s32 %s14, 1
      %p268 = scmp.lt.s32.totalorder %s19, 1
      %s269 = scalar_select %p268, %s19, 1
      %s270 = smul.addr %s269, 4
      %s271 = smul.addr %s270, 8
      %s272 = scalar_lea.vmem %s0, %s271
      %p273 = pneg %p40
      %p274 = pneg %p37
      %p275 = pneg %p61
      %p276 = pneg %p58
      %p277 = pneg %p82
      %p278 = pneg %p79
      %p279 = pneg %p103
      %p280 = pneg %p100
      %p281 = pneg %p124
      %p282 = pneg %p121
      %p283 = pneg %p145
      %p284 = pneg %p142
      %p285 = pneg %p166
      %p286 = pneg %p163
      %p287 = pneg %p187
      %p288 = pneg %p184
      %p289 = pneg %p213
      %p290 = pneg %p210
      %p291 = scmp.lt.s32.totalorder %s19, 1
      %s292 = scalar_select %p291, %s19, 1
      %s293 = smul.addr %s292, 4
      %s294 = smul.addr %s293, 8
      %s295 = scalar_lea.vmem %s8, %s294
      %p296 = scmp.lt.s32.totalorder %s19, 1
      %s297 = scalar_select %p296, %s19, 1
      %s298 = smul.addr %s297, 4
      %s299 = smul.addr %s298, 8
      %s300 = scalar_lea.vmem %s0, %s299
      %p301 = scmp.lt.s32.totalorder %s19, 1
      %s302 = scalar_select %p301, %s19, 1
      %s303 = smul.addr %s302, 4
      %s304 = smul.addr %s303, 8
      %s305 = scalar_lea.vmem %s8, %s304
      %v306 = vld [vmem:[%s300] sm:$0xff]
      %v307 = vld [vmem:[%s300 + $0x8] sm:$0xff]
      %v308 = vld [vmem:[%s300 + $0x10] sm:$0xff]
      %v309 = vld [vmem:[%s300 + $0x18] sm:$0xff]
      %v310 = vld [vmem:[%s7] ss:$8 sm:$0x3]
      %s311 = scalar_lea.vmem %s7, 1
      %v312 = vld [vmem:[%s311] ss:$8 sm:$0x3]
      %s313 = scalar_lea.vmem %s7, 2
      %v314 = vld [vmem:[%s313] ss:$8 sm:$0x3]
      %s315 = scalar_lea.vmem %s7, 3
      %v316 = vld [vmem:[%s315] ss:$8 sm:$0x3]
      %s317 = scalar_lea.vmem %s7, 5
      %v318 = vld [vmem:[%s317] ss:$8 sm:$0x3]
      %s319 = scalar_lea.vmem %s7, 6
      %v320 = vld [vmem:[%s319] ss:$8 sm:$0x3]
      %s321 = scalar_lea.vmem %s7, 7
      %v322 = vld [vmem:[%s321] ss:$8 sm:$0x3]
      %s323 = scalar_lea.vmem %s7, 16
      %v324 = vld [vmem:[%s323] ss:$8 sm:$0x3]
      %v325 = vld [vmem:[%s1] sm:$0xff]
      %v326 = vld [vmem:[%s1 + $0x8] sm:$0xff]
      %v327 = vld [vmem:[%s1 + $0x10] sm:$0xff]
      %v328 = vld [vmem:[%s1 + $0x18] sm:$0xff]
      %329 = vrot.lane.b32.xlu0 %v306, 17
      %v330 = vpop.permute.xlu0 %329
      %331 = vrot.lane.b32.xlu0 %v308, 17
      %v332 = vpop.permute.xlu0 %331
      %333 = vrot.lane.b32.xlu0 %v307, 17
      %v334 = vpop.permute.xlu0 %333
      %335 = vrot.lane.b32.xlu0 %v309, 17
      %v336 = vpop.permute.xlu0 %335
      %v337 = vlaneseq
      %v338 = vand.u32 %v337, 127
      %vm339 = vcmp.lt.s32.totalorder %v338, 17
      %v340 = vsel %vm339, %v330, %v334
      %v341 = vsel %vm339, %v332, %v336
      %v342 = vsel %vm339, %v334, %v330
      %v343 = vsel %vm339, %v336, %v332
      %v345 = vlaneseq
      %v346 = vshrl.u32 %v345, 7
      %v347 = vsub.s32 0, %v346
      %v348 = vrot.slane %v310, %v347
      %v349 = vlaneseq
      %v350 = vshrl.u32 %v349, 7
      %v351 = vsub.s32 1, %v350
      %v352 = vrot.slane %v310, %v351
      %v355 = vmul.f32 %v342, %v348
      %v356 = vmul.f32 %v340, %v352
      %v357 = vmul.f32 %v343, %v348
      %v358 = vmul.f32 %v341, %v352
      %359 = vrot.lane.b32.xlu0 %v306, 16
      %v360 = vpop.permute.xlu0 %359
      %361 = vrot.lane.b32.xlu0 %v308, 16
      %v362 = vpop.permute.xlu0 %361
      %363 = vrot.lane.b32.xlu0 %v307, 16
      %v364 = vpop.permute.xlu0 %363
      %365 = vrot.lane.b32.xlu0 %v309, 16
      %v366 = vpop.permute.xlu0 %365
      %vm367 = vcmp.lt.s32.totalorder %v338, 16
      %v368 = vsel %vm367, %v360, %v364
      %v369 = vsel %vm367, %v362, %v366
      %v370 = vsel %vm367, %v364, %v360
      %v371 = vsel %vm367, %v366, %v362
      %v373 = vlaneseq
      %v374 = vshrl.u32 %v373, 7
      %v375 = vsub.s32 0, %v374
      %v376 = vrot.slane %v312, %v375
      %v377 = vlaneseq
      %v378 = vshrl.u32 %v377, 7
      %v379 = vsub.s32 1, %v378
      %v380 = vrot.slane %v312, %v379
      %v383 = vmul.f32 %v370, %v376
      %v384 = vmul.f32 %v368, %v380
      %v385 = vmul.f32 %v371, %v376
      %v386 = vmul.f32 %v369, %v380
      %387 = vrot.lane.b32.xlu0 %v306, 15
      %v388 = vpop.permute.xlu0 %387
      %389 = vrot.lane.b32.xlu0 %v308, 15
      %v390 = vpop.permute.xlu0 %389
      %391 = vrot.lane.b32.xlu0 %v307, 15
      %v392 = vpop.permute.xlu0 %391
      %393 = vrot.lane.b32.xlu0 %v309, 15
      %v394 = vpop.permute.xlu0 %393
      %vm395 = vcmp.lt.s32.totalorder %v338, 15
      %v396 = vsel %vm395, %v388, %v392
      %v397 = vsel %vm395, %v390, %v394
      %v398 = vsel %vm395, %v392, %v388
      %v399 = vsel %vm395, %v394, %v390
      %v401 = vlaneseq
      %v402 = vshrl.u32 %v401, 7
      %v403 = vsub.s32 0, %v402
      %v404 = vrot.slane %v314, %v403
      %v405 = vlaneseq
      %v406 = vshrl.u32 %v405, 7
      %v407 = vsub.s32 1, %v406
      %v408 = vrot.slane %v314, %v407
      %v411 = vmul.f32 %v398, %v404
      %v412 = vmul.f32 %v396, %v408
      %v413 = vmul.f32 %v399, %v404
      %v414 = vmul.f32 %v397, %v408
      %415 = vrot.lane.b32.xlu0 %v306, 1
      %v416 = vpop.permute.xlu0 %415
      %417 = vrot.lane.b32.xlu0 %v308, 1
      %v418 = vpop.permute.xlu0 %417
      %419 = vrot.lane.b32.xlu0 %v307, 1
      %v420 = vpop.permute.xlu0 %419
      %421 = vrot.lane.b32.xlu0 %v309, 1
      %v422 = vpop.permute.xlu0 %421
      %vm423 = vcmp.lt.s32.totalorder %v338, 1
      %v424 = vsel %vm423, %v416, %v420
      %v425 = vsel %vm423, %v418, %v422
      %v426 = vsel %vm423, %v420, %v416
      %v427 = vsel %vm423, %v422, %v418
      %v429 = vlaneseq
      %v430 = vshrl.u32 %v429, 7
      %v431 = vsub.s32 0, %v430
      %v432 = vrot.slane %v316, %v431
      %v433 = vlaneseq
      %v434 = vshrl.u32 %v433, 7
      %v435 = vsub.s32 1, %v434
      %v436 = vrot.slane %v316, %v435
      %v439 = vmul.f32 %v426, %v432
      %v440 = vmul.f32 %v424, %v436
      %v441 = vmul.f32 %v427, %v432
      %v442 = vmul.f32 %v425, %v436
      %443 = vrot.lane.b32.xlu0 %v306, 127
      %v444 = vpop.permute.xlu0 %443
      %445 = vrot.lane.b32.xlu0 %v308, 127
      %v446 = vpop.permute.xlu0 %445
      %447 = vrot.lane.b32.xlu0 %v307, 127
      %v448 = vpop.permute.xlu0 %447
      %449 = vrot.lane.b32.xlu0 %v309, 127
      %v450 = vpop.permute.xlu0 %449
      %vm451 = vcmp.lt.s32.totalorder %v338, 127
      %v452 = vsel %vm451, %v444, %v448
      %v453 = vsel %vm451, %v446, %v450
      %v454 = vsel %vm451, %v448, %v444
      %v455 = vsel %vm451, %v450, %v446
      %v457 = vlaneseq
      %v458 = vshrl.u32 %v457, 7
      %v459 = vsub.s32 0, %v458
      %v460 = vrot.slane %v318, %v459
      %v461 = vlaneseq
      %v462 = vshrl.u32 %v461, 7
      %v463 = vsub.s32 1, %v462
      %v464 = vrot.slane %v318, %v463
      %v467 = vmul.f32 %v452, %v460
      %v468 = vmul.f32 %v454, %v464
      %v469 = vmul.f32 %v453, %v460
      %v470 = vmul.f32 %v455, %v464
      %471 = vrot.lane.b32.xlu0 %v306, 113
      %v472 = vpop.permute.xlu0 %471
      %473 = vrot.lane.b32.xlu0 %v308, 113
      %v474 = vpop.permute.xlu0 %473
      %475 = vrot.lane.b32.xlu0 %v307, 113
      %v476 = vpop.permute.xlu0 %475
      %477 = vrot.lane.b32.xlu0 %v309, 113
      %v478 = vpop.permute.xlu0 %477
      %vm479 = vcmp.lt.s32.totalorder %v338, 113
      %v480 = vsel %vm479, %v472, %v476
      %v481 = vsel %vm479, %v474, %v478
      %v482 = vsel %vm479, %v476, %v472
      %v483 = vsel %vm479, %v478, %v474
      %v485 = vlaneseq
      %v486 = vshrl.u32 %v485, 7
      %v487 = vsub.s32 0, %v486
      %v488 = vrot.slane %v320, %v487
      %v489 = vlaneseq
      %v490 = vshrl.u32 %v489, 7
      %v491 = vsub.s32 1, %v490
      %v492 = vrot.slane %v320, %v491
      %v495 = vmul.f32 %v480, %v488
      %v496 = vmul.f32 %v482, %v492
      %v497 = vmul.f32 %v481, %v488
      %v498 = vmul.f32 %v483, %v492
      %499 = vrot.lane.b32.xlu0 %v306, 112
      %v500 = vpop.permute.xlu0 %499
      %501 = vrot.lane.b32.xlu0 %v308, 112
      %v502 = vpop.permute.xlu0 %501
      %503 = vrot.lane.b32.xlu0 %v307, 112
      %v504 = vpop.permute.xlu0 %503
      %505 = vrot.lane.b32.xlu0 %v309, 112
      %v506 = vpop.permute.xlu0 %505
      %vm507 = vcmp.lt.s32.totalorder %v338, 112
      %v508 = vsel %vm507, %v500, %v504
      %v509 = vsel %vm507, %v502, %v506
      %v510 = vsel %vm507, %v504, %v500
      %v511 = vsel %vm507, %v506, %v502
      %v513 = vlaneseq
      %v514 = vshrl.u32 %v513, 7
      %v515 = vsub.s32 0, %v514
      %v516 = vrot.slane %v322, %v515
      %v517 = vlaneseq
      %v518 = vshrl.u32 %v517, 7
      %v519 = vsub.s32 1, %v518
      %v520 = vrot.slane %v322, %v519
      %v523 = vmul.f32 %v508, %v516
      %v524 = vmul.f32 %v510, %v520
      %v525 = vmul.f32 %v509, %v516
      %v526 = vmul.f32 %v511, %v520
      %527 = vrot.lane.b32.xlu0 %v306, 111
      %v528 = vpop.permute.xlu0 %527
      %529 = vrot.lane.b32.xlu0 %v308, 111
      %v530 = vpop.permute.xlu0 %529
      %531 = vrot.lane.b32.xlu0 %v307, 111
      %v532 = vpop.permute.xlu0 %531
      %533 = vrot.lane.b32.xlu0 %v309, 111
      %v534 = vpop.permute.xlu0 %533
      %vm535 = vcmp.lt.s32.totalorder %v338, 111
      %v536 = vsel %vm535, %v528, %v532
      %v537 = vsel %vm535, %v530, %v534
      %v538 = vsel %vm535, %v532, %v528
      %v539 = vsel %vm535, %v534, %v530
      %v541 = vlaneseq
      %v542 = vshrl.u32 %v541, 7
      %v543 = vsub.s32 0, %v542
      %v544 = vrot.slane %v324, %v543
      %v545 = vlaneseq
      %v546 = vshrl.u32 %v545, 7
      %v547 = vsub.s32 1, %v546
      %v548 = vrot.slane %v324, %v547
      %v551 = vmul.f32 %v536, %v544
      %v552 = vmul.f32 %v538, %v548
      %v553 = vmul.f32 %v537, %v544
      %v554 = vmul.f32 %v539, %v548
      %vm555 = vcmask 130048
      %v557 = vsel %vm555, %v326, 0
      %v560 = vsel %vm555, %v328, 0
      %562 = vmatprep.subr.mxu0 %v356
      %563 = vmatpush1.msra.mxu0 %v355
      %564 = vmatprep.subr.mxu0 %v358
      %565 = vmatpush1.msra.mxu0 %v357
      %566 = vmatprep.subr.mxu0 %v384
      %567 = vmatpush1.msra.mxu0 %v383
      %568 = vmatprep.subr.mxu0 %v386
      %569 = vmatpush1.msra.mxu0 %v385
      %570 = vmatprep.subr.mxu0 %v412
      %571 = vmatpush1.msra.mxu0 %v411
      %572 = vmatprep.subr.mxu0 %v414
      %573 = vmatpush1.msra.mxu0 %v413
      %574 = vmatprep.subr.mxu0 %v440
      %575 = vmatpush1.msra.mxu0 %v439
      %576 = vmatprep.subr.mxu0 %v442
      %577 = vmatpush1.msra.mxu0 %v441
      %578 = vmatprep.subr.mxu0 %v307
      %579 = vmatpush1.msra.mxu0 %v306
      %580 = vmatprep.subr.mxu0 %v309
      %581 = vmatpush1.msra.mxu0 %v308
      %582 = vmatprep.subr.mxu0 %v468
      %583 = vmatpush1.msra.mxu0 %v467
      %584 = vmatprep.subr.mxu0 %v470
      %585 = vmatpush1.msra.mxu0 %v469
      %586 = vmatprep.subr.mxu0 %v496
      %587 = vmatpush1.msra.mxu0 %v495
      %588 = vmatprep.subr.mxu0 %v498
      %589 = vmatpush1.msra.mxu0 %v497
      %590 = vmatprep.subr.mxu0 %v524
      %591 = vmatpush1.msra.mxu0 %v523
      %592 = vmatprep.subr.mxu0 %v526
      %593 = vmatpush1.msra.mxu0 %v525
      %594 = vmatprep.subr.mxu0 %v552
      %595 = vmatpush1.msra.mxu0 %v551
      %596 = vmatprep.subr.mxu0 %v554
      %597 = vmatpush1.msra.mxu0 %v553
      %598 = vmatprep.subr.mxu0 0.0
      %599 = vmatpush1.msra.mxu0 0.0
      %600 = vmatprep.subr.mxu0 0.0
      %601 = vmatpush1.msra.mxu0 0.0
      %602 = vmatprep.subr.mxu0 0.0
      %603 = vmatpush1.msra.mxu0 0.0
      %604 = vmatprep.subr.mxu0 0.0
      %605 = vmatpush1.msra.mxu0 0.0
      %606 = vmatprep.subr.mxu0 0.0
      %607 = vmatpush1.msra.mxu0 0.0
      %608 = vmatprep.subr.mxu0 0.0
      %609 = vmatpush1.msra.mxu0 0.0
      %610 = vmatprep.subr.mxu0 0.0
      %611 = vmatpush1.msra.mxu0 0.0
      %612 = vmatprep.subr.mxu0 0.0
      %613 = vmatpush1.msra.mxu0 0.0
      %614 = vmatprep.subr.mxu0 0.0
      %615 = vmatpush1.msra.mxu0 0.0
      %616 = vmatprep.subr.mxu0 0.0
      %617 = vmatpush1.msra.mxu0 0.0
      %618 = vmatprep.subr.mxu0 0.0
      %619 = vmatpush1.msra.mxu0 0.0
      %620 = vmatprep.subr.mxu0 0.0
      %621 = vmatpush1.msra.mxu0 0.0
      %622 = vmatprep.subr.mxu0 0.0
      %623 = vmatpush1.msra.mxu0 0.0
      %624 = vmatprep.subr.mxu0 0.0
      %625 = vmatpush1.msra.mxu0 0.0
      %626 = vmatprep.mubr.f32.mxu0 %v557
      %627 = vmatmul.mubr.f32.gmra.mrb[0].mxu0 %v325
      %v628 = vpop.f32.mrb[0].mxu0
      %v629 = vadd.f32 0.0, %v628
      %v630 = vpop.f32.mrb[0].mxu0
      %v631 = vadd.f32 0.0, %v630
      %632 = vmatprep.mubr.f32.mxu0 %v560
      %633 = vmatmul.mubr.f32.gmra.mrb[0].mxu0 %v327
      %v634 = vpop.f32.mrb[0].mxu0
      %v635 = vadd.f32 0.0, %v634
      %v636 = vpop.f32.mrb[0].mxu0
      %v637 = vadd.f32 0.0, %v636
      %638 = vdwg.mxu0
      %v639 = vld [vmem:[%s3] sm:$0xff]
      %v640 = vld [vmem:[%s3 + $0x8] sm:$0xff]
      %642 = vset.pattern.permute.xlu0 0
      %643 = vperm.xlu0 %642, %v639
      %v644 = vpop.permute.xlu0 %643
      %647 = vset.pattern.permute.xlu0 0
      %648 = vperm.xlu0 %647, %v640
      %v649 = vpop.permute.xlu0 %648
      %v651 = vmul.f32 %v629, %v644
      %v652 = vmul.f32 %v631, %v644
      %v653 = vmul.f32 %v635, %v649
      %v654 = vmul.f32 %v637, %v649
      %v655 = vld [vmem:[%s4] sm:$0xff]
      %v656 = vld [vmem:[%s4 + $0x8] sm:$0xff]
      %658 = vset.pattern.permute.xlu0 0
      %659 = vperm.xlu0 %658, %v655
      %v660 = vpop.permute.xlu0 %659
      %663 = vset.pattern.permute.xlu0 0
      %664 = vperm.xlu0 %663, %v656
      %v665 = vpop.permute.xlu0 %664
      %v667 = vadd.f32 %v651, %v660
      %v668 = vadd.f32 %v652, %v660
      %v669 = vadd.f32 %v653, %v665
      %v670 = vadd.f32 %v654, %v665
      %v671 = vmax.f32 %v667, 0.0
      %v672 = vmax.f32 %v668, 0.0
      %v673 = vmax.f32 %v669, 0.0
      %v674 = vmax.f32 %v670, 0.0
      %v675 = vld [vmem:[%s2] sm:$0xff]
      %v676 = vld [vmem:[%s2 + $0x8] sm:$0xff]
      %v677 = vld [vmem:[%s2 + $0x10] sm:$0xff]
      %v678 = vld [vmem:[%s2 + $0x18] sm:$0xff]
      %679 = vrot.lane.b32.xlu0 %v671, 17
      %v680 = vpop.permute.xlu0 %679
      %681 = vrot.lane.b32.xlu0 %v673, 17
      %v682 = vpop.permute.xlu0 %681
      %683 = vrot.lane.b32.xlu0 %v672, 17
      %v684 = vpop.permute.xlu0 %683
      %685 = vrot.lane.b32.xlu0 %v674, 17
      %v686 = vpop.permute.xlu0 %685
      %v687 = vsel %vm339, %v680, %v684
      %v688 = vsel %vm339, %v682, %v686
      %v689 = vsel %vm339, %v684, %v680
      %v690 = vsel %vm339, %v686, %v682
      %v691 = vmul.f32 %v689, %v348
      %v692 = vmul.f32 %v687, %v352
      %v693 = vmul.f32 %v690, %v348
      %v694 = vmul.f32 %v688, %v352
      %695 = vrot.lane.b32.xlu0 %v671, 16
      %v696 = vpop.permute.xlu0 %695
      %697 = vrot.lane.b32.xlu0 %v673, 16
      %v698 = vpop.permute.xlu0 %697
      %699 = vrot.lane.b32.xlu0 %v672, 16
      %v700 = vpop.permute.xlu0 %699
      %701 = vrot.lane.b32.xlu0 %v674, 16
      %v702 = vpop.permute.xlu0 %701
      %v703 = vsel %vm367, %v696, %v700
      %v704 = vsel %vm367, %v698, %v702
      %v705 = vsel %vm367, %v700, %v696
      %v706 = vsel %vm367, %v702, %v698
      %v707 = vmul.f32 %v705, %v376
      %v708 = vmul.f32 %v703, %v380
      %v709 = vmul.f32 %v706, %v376
      %v710 = vmul.f32 %v704, %v380
      %711 = vrot.lane.b32.xlu0 %v671, 15
      %v712 = vpop.permute.xlu0 %711
      %713 = vrot.lane.b32.xlu0 %v673, 15
      %v714 = vpop.permute.xlu0 %713
      %715 = vrot.lane.b32.xlu0 %v672, 15
      %v716 = vpop.permute.xlu0 %715
      %717 = vrot.lane.b32.xlu0 %v674, 15
      %v718 = vpop.permute.xlu0 %717
      %v719 = vsel %vm395, %v712, %v716
      %v720 = vsel %vm395, %v714, %v718
      %v721 = vsel %vm395, %v716, %v712
      %v722 = vsel %vm395, %v718, %v714
      %v723 = vmul.f32 %v721, %v404
      %v724 = vmul.f32 %v719, %v408
      %v725 = vmul.f32 %v722, %v404
      %v726 = vmul.f32 %v720, %v408
      %727 = vrot.lane.b32.xlu0 %v671, 1
      %v728 = vpop.permute.xlu0 %727
      %729 = vrot.lane.b32.xlu0 %v673, 1
      %v730 = vpop.permute.xlu0 %729
      %731 = vrot.lane.b32.xlu0 %v672, 1
      %v732 = vpop.permute.xlu0 %731
      %733 = vrot.lane.b32.xlu0 %v674, 1
      %v734 = vpop.permute.xlu0 %733
      %v735 = vsel %vm423, %v728, %v732
      %v736 = vsel %vm423, %v730, %v734
      %v737 = vsel %vm423, %v732, %v728
      %v738 = vsel %vm423, %v734, %v730
      %v739 = vmul.f32 %v737, %v432
      %v740 = vmul.f32 %v735, %v436
      %v741 = vmul.f32 %v738, %v432
      %v742 = vmul.f32 %v736, %v436
      %743 = vrot.lane.b32.xlu0 %v671, 127
      %v744 = vpop.permute.xlu0 %743
      %745 = vrot.lane.b32.xlu0 %v673, 127
      %v746 = vpop.permute.xlu0 %745
      %747 = vrot.lane.b32.xlu0 %v672, 127
      %v748 = vpop.permute.xlu0 %747
      %749 = vrot.lane.b32.xlu0 %v674, 127
      %v750 = vpop.permute.xlu0 %749
      %v751 = vsel %vm451, %v744, %v748
      %v752 = vsel %vm451, %v746, %v750
      %v753 = vsel %vm451, %v748, %v744
      %v754 = vsel %vm451, %v750, %v746
      %v755 = vmul.f32 %v751, %v460
      %v756 = vmul.f32 %v753, %v464
      %v757 = vmul.f32 %v752, %v460
      %v758 = vmul.f32 %v754, %v464
      %759 = vrot.lane.b32.xlu0 %v671, 113
      %v760 = vpop.permute.xlu0 %759
      %761 = vrot.lane.b32.xlu0 %v673, 113
      %v762 = vpop.permute.xlu0 %761
      %763 = vrot.lane.b32.xlu0 %v672, 113
      %v764 = vpop.permute.xlu0 %763
      %765 = vrot.lane.b32.xlu0 %v674, 113
      %v766 = vpop.permute.xlu0 %765
      %v767 = vsel %vm479, %v760, %v764
      %v768 = vsel %vm479, %v762, %v766
      %v769 = vsel %vm479, %v764, %v760
      %v770 = vsel %vm479, %v766, %v762
      %v771 = vmul.f32 %v767, %v488
      %v772 = vmul.f32 %v769, %v492
      %v773 = vmul.f32 %v768, %v488
      %v774 = vmul.f32 %v770, %v492
      %775 = vrot.lane.b32.xlu0 %v671, 112
      %v776 = vpop.permute.xlu0 %775
      %777 = vrot.lane.b32.xlu0 %v673, 112
      %v778 = vpop.permute.xlu0 %777
      %779 = vrot.lane.b32.xlu0 %v672, 112
      %v780 = vpop.permute.xlu0 %779
      %781 = vrot.lane.b32.xlu0 %v674, 112
      %v782 = vpop.permute.xlu0 %781
      %v783 = vsel %vm507, %v776, %v780
      %v784 = vsel %vm507, %v778, %v782
      %v785 = vsel %vm507, %v780, %v776
      %v786 = vsel %vm507, %v782, %v778
      %v787 = vmul.f32 %v783, %v516
      %v788 = vmul.f32 %v785, %v520
      %v789 = vmul.f32 %v784, %v516
      %v790 = vmul.f32 %v786, %v520
      %791 = vrot.lane.b32.xlu0 %v671, 111
      %v792 = vpop.permute.xlu0 %791
      %793 = vrot.lane.b32.xlu0 %v673, 111
      %v794 = vpop.permute.xlu0 %793
      %795 = vrot.lane.b32.xlu0 %v672, 111
      %v796 = vpop.permute.xlu0 %795
      %797 = vrot.lane.b32.xlu0 %v674, 111
      %v798 = vpop.permute.xlu0 %797
      %v799 = vsel %vm535, %v792, %v796
      %v800 = vsel %vm535, %v794, %v798
      %v801 = vsel %vm535, %v796, %v792
      %v802 = vsel %vm535, %v798, %v794
      %v803 = vmul.f32 %v799, %v544
      %v804 = vmul.f32 %v801, %v548
      %v805 = vmul.f32 %v800, %v544
      %v806 = vmul.f32 %v802, %v548
      %v808 = vsel %vm555, %v676, 0
      %v811 = vsel %vm555, %v678, 0
      %813 = vmatprep.subr.mxu0 %v692
      %814 = vmatpush1.msra.mxu0 %v691
      %815 = vmatprep.subr.mxu0 %v694
      %816 = vmatpush1.msra.mxu0 %v693
      %817 = vmatprep.subr.mxu0 %v708
      %818 = vmatpush1.msra.mxu0 %v707
      %819 = vmatprep.subr.mxu0 %v710
      %820 = vmatpush1.msra.mxu0 %v709
      %821 = vmatprep.subr.mxu0 %v724
      %822 = vmatpush1.msra.mxu0 %v723
      %823 = vmatprep.subr.mxu0 %v726
      %824 = vmatpush1.msra.mxu0 %v725
      %825 = vmatprep.subr.mxu0 %v740
      %826 = vmatpush1.msra.mxu0 %v739
      %827 = vmatprep.subr.mxu0 %v742
      %828 = vmatpush1.msra.mxu0 %v741
      %829 = vmatprep.subr.mxu0 %v672
      %830 = vmatpush1.msra.mxu0 %v671
      %831 = vmatprep.subr.mxu0 %v674
      %832 = vmatpush1.msra.mxu0 %v673
      %833 = vmatprep.subr.mxu0 %v756
      %834 = vmatpush1.msra.mxu0 %v755
      %835 = vmatprep.subr.mxu0 %v758
      %836 = vmatpush1.msra.mxu0 %v757
      %837 = vmatprep.subr.mxu0 %v772
      %838 = vmatpush1.msra.mxu0 %v771
      %839 = vmatprep.subr.mxu0 %v774
      %840 = vmatpush1.msra.mxu0 %v773
      %841 = vmatprep.subr.mxu0 %v788
      %842 = vmatpush1.msra.mxu0 %v787
      %843 = vmatprep.subr.mxu0 %v790
      %844 = vmatpush1.msra.mxu0 %v789
      %845 = vmatprep.subr.mxu0 %v804
      %846 = vmatpush1.msra.mxu0 %v803
      %847 = vmatprep.subr.mxu0 %v806
      %848 = vmatpush1.msra.mxu0 %v805
      %849 = vmatprep.subr.mxu0 0.0
      %850 = vmatpush1.msra.mxu0 0.0
      %851 = vmatprep.subr.mxu0 0.0
      %852 = vmatpush1.msra.mxu0 0.0
      %853 = vmatprep.subr.mxu0 0.0
      %854 = vmatpush1.msra.mxu0 0.0
      %855 = vmatprep.subr.mxu0 0.0
      %856 = vmatpush1.msra.mxu0 0.0
      %857 = vmatprep.subr.mxu0 0.0
      %858 = vmatpush1.msra.mxu0 0.0
      %859 = vmatprep.subr.mxu0 0.0
      %860 = vmatpush1.msra.mxu0 0.0
      %861 = vmatprep.subr.mxu0 0.0
      %862 = vmatpush1.msra.mxu0 0.0
      %863 = vmatprep.subr.mxu0 0.0
      %864 = vmatpush1.msra.mxu0 0.0
      %865 = vmatprep.subr.mxu0 0.0
      %866 = vmatpush1.msra.mxu0 0.0
      %867 = vmatprep.subr.mxu0 0.0
      %868 = vmatpush1.msra.mxu0 0.0
      %869 = vmatprep.subr.mxu0 0.0
      %870 = vmatpush1.msra.mxu0 0.0
      %871 = vmatprep.subr.mxu0 0.0
      %872 = vmatpush1.msra.mxu0 0.0
      %873 = vmatprep.subr.mxu0 0.0
      %874 = vmatpush1.msra.mxu0 0.0
      %875 = vmatprep.subr.mxu0 0.0
      %876 = vmatpush1.msra.mxu0 0.0
      %877 = vmatprep.mubr.f32.mxu0 %v808
      %878 = vmatmul.mubr.f32.gmra.mrb[0].mxu0 %v675
      %v879 = vpop.f32.mrb[0].mxu0
      %v880 = vadd.f32 0.0, %v879
      %v881 = vpop.f32.mrb[0].mxu0
      %v882 = vadd.f32 0.0, %v881
      %883 = vmatprep.mubr.f32.mxu0 %v811
      %884 = vmatmul.mubr.f32.gmra.mrb[0].mxu0 %v677
      %v885 = vpop.f32.mrb[0].mxu0
      %v886 = vadd.f32 0.0, %v885
      %v887 = vpop.f32.mrb[0].mxu0
      %v888 = vadd.f32 0.0, %v887
      %889 = vdwg.mxu0
      %v890 = vld [vmem:[%s5] sm:$0xff]
      %v891 = vld [vmem:[%s5 + $0x8] sm:$0xff]
      %893 = vset.pattern.permute.xlu0 0
      %894 = vperm.xlu0 %893, %v890
      %v895 = vpop.permute.xlu0 %894
      %898 = vset.pattern.permute.xlu0 0
      %899 = vperm.xlu0 %898, %v891
      %v900 = vpop.permute.xlu0 %899
      %v902 = vmul.f32 %v880, %v895
      %v903 = vmul.f32 %v882, %v895
      %v904 = vmul.f32 %v886, %v900
      %v905 = vmul.f32 %v888, %v900
      %v906 = vld [vmem:[%s6] sm:$0xff]
      %v907 = vld [vmem:[%s6 + $0x8] sm:$0xff]
      %909 = vset.pattern.permute.xlu0 0
      %910 = vperm.xlu0 %909, %v906
      %v911 = vpop.permute.xlu0 %910
      %914 = vset.pattern.permute.xlu0 0
      %915 = vperm.xlu0 %914, %v907
      %v916 = vpop.permute.xlu0 %915
      %v918 = vadd.f32 %v902, %v911
      %v919 = vadd.f32 %v903, %v911
      %v920 = vadd.f32 %v904, %v916
      %v921 = vadd.f32 %v905, %v916
      %v922 = vadd.f32 %v918, %v306
      %v923 = vadd.f32 %v919, %v307
      %v924 = vadd.f32 %v920, %v308
      %v925 = vadd.f32 %v921, %v309
      %v926 = vmax.f32 %v922, 0.0
      %v927 = vmax.f32 %v923, 0.0
      %v928 = vmax.f32 %v924, 0.0
      %v929 = vmax.f32 %v925, 0.0
      %930 = vst [vmem:[%s305] sm:$0xff] %v926
      %931 = vst [vmem:[%s305 + $0x8] sm:$0xff] %v927
      %932 = vst [vmem:[%s305 + $0x10] sm:$0xff] %v928
      %933 = vst [vmem:[%s305 + $0x18] sm:$0xff] %v929
      %p934 = scmp.lt.s32.totalorder %s19, 1
      %s935 = scalar_select %p934, %s19, 1
      %s936 = smul.addr %s935, 4
      %s937 = smul.addr %s936, 8
      %s938 = scalar_lea.vmem %s8, %s937
      // Predicated region
      $region53: #{basic_block_encoder.1} parent=51 // pred_check
        %p939 = pneg %p210
      $region54: #{basic_block_encoder.1} parent=51 // pred_check_branch
        %941 = sbr.rel (%p939) target = $region56
      $region55: #{basic_block_encoder.1} parent=51 // pred_region
        _
      $region56: #{basic_block_encoder.1} parent=51 // pred_fallthru
        _
    $region52: #{basic_block_encoder.1} parent=5 // pred_fallthru
      _
    %p942 = scmp.le.s32.totalorder 2, %s14
    // Predicated region
    $region57: #{basic_block_encoder.1} parent=5 // pred_check
      %p943 = pneg %p942
    $region58: #{basic_block_encoder.1} parent=5 // pred_check_branch
      %945 = sbr.rel (%p943) target = $region60
    $region59: #{basic_block_encoder.1} parent=5 // pred_region
      %s946 = ssub.s32 %s14, 2
      // Predicated region
      $region61: #{basic_block_encoder.1} parent=59 // pred_check
        %p947 = pneg %p216
      $region62: #{basic_block_encoder.1} parent=59 // pred_check_branch
        %949 = sbr.rel (%p947) target = $region64
      $region63: #{basic_block_encoder.1} parent=59 // pred_region
        %p950 = scmp.lt.s32.totalorder %s20, 1
        %s951 = scalar_select %p950, %s20, 1
        %s952 = smul.addr %s951, 4
        %s953 = smul.addr %s952, 8
        %s954 = scalar_lea.vmem %s8, %s953
      $region64: #{basic_block_encoder.1} parent=59 // pred_fallthru
        _
    $region60: #{basic_block_encoder.1} parent=5 // pred_fallthru
      _
  $region6: #{basic_block_encoder.1} parent=0 // loop_footer
    %s18 = sadd.s32 1, %s14
  $region7: #{basic_block_encoder.1} parent=0 // loop_footer_branch
    %13 = sbr.rel target = $region3
  $region8: #{basic_block_encoder.1} parent=0 // loop_exit
    _

</llo_original>
